<compile_context>
chip_gen: v5e
topology: v5e:2x2
jax: 0.10.0
libtpu: 0.0.40
codegen_flags: <defaults>
</compile_context>

<pallas_src>
import functools

import jax
import jax.numpy as jnp
from jax.experimental import pallas as pl
from jax.experimental.pallas import tpu as pltpu


def _fm_kernel_flat(x_ref, o_ref, *, num_fields, embed_dim):
    # x_ref block: (bt, F*D); o_ref block: (bt, 1)
    x = x_ref[...].astype(jnp.float32)
    # Field sum via plain VPU adds over 128-aligned static lane slices.
    s = x[:, 0:embed_dim]
    for f in range(1, num_fields):
        s = s + x[:, f * embed_dim:(f + 1) * embed_dim]
    square_of_sum = jnp.sum(s * s, axis=1, keepdims=True)        # (bt, 1)
    # sum_f sum_d x^2 is a single full-row reduce over the flattened F*D axis.
    sum_of_square = jnp.sum(x * x, axis=1, keepdims=True)        # (bt, 1)
    o_ref[...] = (0.5 * (square_of_sum - sum_of_square)).astype(o_ref.dtype)


def _fm_kernel_3d(x_ref, o_ref):
    # Fallback for D % 128 != 0.  x_ref block: (bt, F, D); o_ref block: (bt, 1)
    x = x_ref[...].astype(jnp.float32)
    s = jnp.sum(x, axis=1)                                       # (bt, D)
    sq = jnp.sum(x * x, axis=1)                                  # (bt, D)
    o_ref[...] = (0.5 * jnp.sum(s * s - sq, axis=1, keepdims=True)
                  ).astype(o_ref.dtype)


def _round_up(v, m):
    return ((v + m - 1) // m) * m


def _pick_batch_tile(batch, row_bytes, requested, target_block_bytes):
    if requested is not None:
        # Align any user-requested tile to 128 rows for clean (8,128) tiling.
        return _round_up(max(int(requested), 128), 128)
    bt = target_block_bytes // max(row_bytes, 1)
    bt = min(max(bt, 128), 2048)
    bt = (bt // 128) * 128
    b128 = _round_up(batch, 128)
    if bt >= b128:
        # Keep the grid multi-step when the batch allows it (software
        # pipelining + both v7x TensorCores); otherwise one tile covers it.
        bt = max(128, ((b128 // 2) // 128) * 128) if b128 >= 256 else b128
    return bt


def featurization_machine(x, *, batch_tile=None,
                          target_block_bytes=2 * 1024 * 1024):
    """Pallas TPU FM pairwise-interaction reduction.

    x: (B, F, D) array (any float dtype).  Returns (B, 1) float32.
    """
    B, F, D = x.shape
    itemsize = jnp.dtype(x.dtype).itemsize
    row_bytes = F * D * itemsize

    bt = _pick_batch_tile(B, row_bytes, batch_tile, target_block_bytes)
    B_pad = _round_up(B, bt)
    if B_pad != B:
        # Zero rows contribute exactly 0 to the FM term; sliced off below.
        x = jnp.pad(x, ((0, B_pad - B), (0, 0), (0, 0)))

    grid = (B_pad // bt,)

    if D % 128 == 0:
        # Flattened lane-dense layout: small F never hits the sublane axis.
        x_in = x.reshape(B_pad, F * D)
        kernel = functools.partial(_fm_kernel_flat, num_fields=F, embed_dim=D)
        in_spec = pl.BlockSpec((bt, F * D), lambda i: (i, 0))
    else:
        x_in = x
        kernel = _fm_kernel_3d
        in_spec = pl.BlockSpec((bt, F, D), lambda i: (i, 0, 0))

    cost = pl.CostEstimate(
        flops=3 * B * F * D,
        transcendentals=0,
        bytes_accessed=B * F * D * itemsize + B * 4,
    )

    out = pl.pallas_call(
        kernel,
        out_shape=jax.ShapeDtypeStruct((B_pad, 1), jnp.float32),
        grid_spec=pltpu.PrefetchScalarGridSpec(
            num_scalar_prefetch=0,
            grid=grid,
            in_specs=[in_spec],
            out_specs=pl.BlockSpec((bt, 1), lambda i: (i, 0)),
        ),
        compiler_params=pltpu.CompilerParams(
            dimension_semantics=("parallel",),
            vmem_limit_bytes=32 * 1024 * 1024,
        ),
        cost_estimate=cost,
    )(x_in)

    return out[:B]


def _reference(x):
    # Pure-JAX reference mirroring the PyTorch forward exactly (f32 math).
    x = x.astype(jnp.float32)
    square_of_sum = jnp.sum(x, axis=1) ** 2
    sum_of_square = jnp.sum(x ** 2, axis=1)
    return jnp.sum(square_of_sum - sum_of_square, axis=1, keepdims=True) * 0.5


if __name__ == "__main__":
    key = jax.random.PRNGKey(0)
    k1, k2 = jax.random.split(key)

    # Fast (flattened) path: D % 128 == 0; batch is not a tile multiple, so the
    # padding logic and a multi-step pipelined grid are exercised.
    B1, F1, D1 = 520, 4, 128
    x1 = jax.random.normal(k1, (B1, F1, D1), dtype=jnp.float32)
    out1 = jax.block_until_ready(featurization_machine(x1))
    ref1 = _reference(x1)
    assert out1.shape == (B1, 1), out1.shape
    assert jnp.allclose(out1, ref1, atol=2e-3, rtol=1e-4), (
        float(jnp.max(jnp.abs(out1 - ref1))))

    # bf16 input on the same path (halves HBM traffic; f32 accumulation).
    x1_bf16 = x1.astype(jnp.bfloat16)
    out1b = jax.block_until_ready(featurization_machine(x1_bf16))
    ref1b = _reference(x1_bf16)
    assert jnp.allclose(out1b, ref1b, atol=5e-2, rtol=1e-2), (
        float(jnp.max(jnp.abs(out1b - ref1b))))

    # Fallback 3-D path: small D not a multiple of 128.
    B2, F2, D2 = 256, 4, 32
    x2 = jax.random.normal(k2, (B2, F2, D2), dtype=jnp.float32)
    out2 = jax.block_until_ready(featurization_machine(x2))
    ref2 = _reference(x2)
    assert out2.shape == (B2, 1), out2.shape
    assert jnp.allclose(out2, ref2, atol=2e-3, rtol=1e-4), (
        float(jnp.max(jnp.abs(out2 - ref2))))

    print("KERNEL_OK")
</pallas_src>

<mosaic_0001>
module attributes {stable_mosaic.version = 11 : i64} {
  func.func @_fm_kernel_flat(%arg0: i32, %arg1: memref<256x512xf32, #tpu.memory_space<vmem>>, %arg2: memref<256x1xf32, #tpu.memory_space<vmem>>) attributes {dimension_semantics = [#tpu.dimension_semantics<parallel>], iteration_bounds = array<i64: 3>, scalar_prefetch = 0 : i64, scratch_operands = 0 : i64, tpu.core_type = #tpu.core_type<tc>, window_params = [{transform_indices = @transform_0, window_bounds = array<i64: 256, 512>}, {transform_indices = @transform_1, window_bounds = array<i64: 256, 1>}]} {
    %c0 = arith.constant 0 : index
    %c0_0 = arith.constant 0 : index
    %0 = vector.load %arg1[%c0, %c0_0] : memref<256x512xf32, #tpu.memory_space<vmem>>, vector<256x512xf32>
    %1 = vector.extract_strided_slice %0 {offsets = [0, 0], sizes = [256, 128], strides = [1, 1]} : vector<256x512xf32> to vector<256x128xf32>
    %2 = vector.extract_strided_slice %0 {offsets = [0, 128], sizes = [256, 128], strides = [1, 1]} : vector<256x512xf32> to vector<256x128xf32>
    %3 = arith.addf %1, %2 : vector<256x128xf32>
    %4 = vector.extract_strided_slice %0 {offsets = [0, 256], sizes = [256, 128], strides = [1, 1]} : vector<256x512xf32> to vector<256x128xf32>
    %5 = arith.addf %3, %4 : vector<256x128xf32>
    %6 = vector.extract_strided_slice %0 {offsets = [0, 384], sizes = [256, 128], strides = [1, 1]} : vector<256x512xf32> to vector<256x128xf32>
    %7 = arith.addf %5, %6 : vector<256x128xf32>
    %8 = arith.mulf %7, %7 : vector<256x128xf32>
    %cst = arith.constant dense<0.000000e+00> : vector<256xf32>
    %9 = vector.multi_reduction <add>, %8, %cst [1] : vector<256x128xf32> to vector<256xf32>
    %10 = vector.shape_cast %9 : vector<256xf32> to vector<256x1xf32>
    %11 = arith.mulf %0, %0 : vector<256x512xf32>
    %cst_1 = arith.constant dense<0.000000e+00> : vector<256xf32>
    %12 = vector.multi_reduction <add>, %11, %cst_1 [1] : vector<256x512xf32> to vector<256xf32>
    %13 = vector.shape_cast %12 : vector<256xf32> to vector<256x1xf32>
    %14 = arith.subf %10, %13 : vector<256x1xf32>
    %cst_2 = arith.constant 5.000000e-01 : f32
    %15 = vector.broadcast %cst_2 : f32 to vector<256x1xf32>
    %16 = arith.mulf %15, %14 : vector<256x1xf32>
    %c0_3 = arith.constant 0 : index
    %c0_4 = arith.constant 0 : index
    %17 = vector.load %arg2[%c0_3, %c0_4] : memref<256x1xf32, #tpu.memory_space<vmem>>, vector<256x1xf32>
    tpu.vector_store %arg2[%c0_3, %c0_4], %16 {strides = array<i32>} : memref<256x1xf32, #tpu.memory_space<vmem>>, vector<256x1xf32>,
    return
  }
  func.func @transform_0(%arg0: i32) -> (i32, i32) {
    %c0_i32 = arith.constant 0 : i32
    %c0_i32_0 = arith.constant 0 : i32
    return %arg0, %c0_i32 : i32, i32
  }
  func.func @transform_1(%arg0: i32) -> (i32, i32) {
    %c0_i32 = arith.constant 0 : i32
    %c0_i32_0 = arith.constant 0 : i32
    return %arg0, %c0_i32 : i32, i32
  }
}

</mosaic_0001>

<llo_original>
// kernel: tpu_custom_call.1
$region0: #{tpu_custom_call.1}
  #allocation0 [shape = 'u32[]', space=smem, size = 0x4, offset = 0x4, fixed_abs, tag = 'smem constant byte address 0x4 - core index']
  #allocation1 [shape = 'u32[72,128]{1,0:T(1,128)}', space=vmem, size = 0x9000, scoped, tag = 'internal scratch']
  %s0 = inlined_call_operand.hbm [shape: f32[768,512], index: 0, kind: input, shape index: {}]
  %s1 = inlined_call_operand.vmem [shape: f32[768,1], index: 1, kind: output, shape index: {}]
  %s2 = sld [smem:[#allocation0]]
  $region41: #{tpu_custom_call.1} parent=0
    _
  %s4 = ssub.s32 1, %s2
  %s5 = scalar_select 0, %s4, %s2
  $region1: #{tpu_custom_call.1} parent=0
    #allocation2 [shape = 'u8[1048576]{0}', space=vmem, size = 0x100000, scoped, tag = 'input window, operand 0']
    #allocation3 [shape = 's32[2]{0}', space=sflag, size = 0x8, scoped, tag = 'scoped memory for tpu_custom_call.1']
    %6 = vsyncpa [#allocation3], 0
    %s7 = scalar_lea.sflag [#allocation3], 1
    %8 = vsyncpa %s7, 0
    loop: start=0, step=1, limit=5
    $region2: #{tpu_custom_call.1} parent=1 // loop_pre_header
      _
    $region3: #{tpu_custom_call.1} parent=1 // loop_header
      %s10 = sphi 0, %s14
      %p11 = scmp.ge.s32.totalorder %s10, 5
      %s20 = sphi 0, %s22
      %s23 = sphi 0, %s20
      %s24 = sphi 0, %s23
      %s40 = sphi 0, %s24
      %s46 = sphi 0, %s48
      %s49 = sphi 0, %s46
      %s50 = sphi 0, %s49
      %s66 = sphi 0, %s50
    $region4: #{tpu_custom_call.1} parent=1 // loop_header_branch
      %13 = sbr.rel (%p11) target = $region8
    $region5: #{tpu_custom_call.1} parent=1 // loop_body
      %s15 = ssub.s32 %s10, 1
      %s16 = ssub.s32 %s10, 2
      %s17 = sadd.s32 %s10, 1
      %s18 = ssub.s32 %s10, %s17
      %p19 = scmp.eq.s32.totalorder %s18, 0
      %s21 = sadd.s32 %s20, 1
      %s22 = scalar_select %p19, %s20, %s21
      %p25 = pneg %p19
      %p26 = scmp.eq.s32.totalorder %s10, 2
      %p27 = por %p25, %p26
      %p28 = scmp.ne.s32.totalorder %s20, %s23
      %p29 = scmp.eq.s32.totalorder %s10, 0
      %p30 = por %p28, %p29
      %p31 = scmp.ne.s32.totalorder %s20, %s23
      %p32 = scmp.eq.s32.totalorder %s15, 2
      %p33 = por %p31, %p32
      %p34 = scmp.ne.s32.totalorder %s23, %s24
      %p35 = scmp.eq.s32.totalorder %s15, 0
      %p36 = por %p34, %p35
      %p37 = scmp.ne.s32.totalorder %s23, %s24
      %p38 = scmp.eq.s32.totalorder %s16, 2
      %p39 = por %p37, %p38
      %p41 = scmp.ne.s32.totalorder %s24, %s40
      %p42 = scmp.eq.s32.totalorder %s16, 0
      %p43 = por %p41, %p42
      %s44 = ssub.s32 %s10, %s17
      %p45 = scmp.eq.s32.totalorder %s44, 0
      %s47 = sadd.s32 %s46, 1
      %s48 = scalar_select %p45, %s46, %s47
      %p51 = pneg %p45
      %p52 = scmp.eq.s32.totalorder %s10, 2
      %p53 = por %p51, %p52
      %p54 = scmp.ne.s32.totalorder %s46, %s49
      %p55 = scmp.eq.s32.totalorder %s10, 0
      %p56 = por %p54, %p55
      %p57 = scmp.ne.s32.totalorder %s46, %s49
      %p58 = scmp.eq.s32.totalorder %s15, 2
      %p59 = por %p57, %p58
      %p60 = scmp.ne.s32.totalorder %s49, %s50
      %p61 = scmp.eq.s32.totalorder %s15, 0
      %p62 = por %p60, %p61
      %p63 = scmp.ne.s32.totalorder %s49, %s50
      %p64 = scmp.eq.s32.totalorder %s16, 2
      %p65 = por %p63, %p64
      %p67 = scmp.ne.s32.totalorder %s50, %s66
      %p68 = scmp.eq.s32.totalorder %s16, 0
      %p69 = por %p67, %p68
      %p70 = scmp.le.s32.totalorder 1, %s10
      %p71 = scmp.lt.s32.totalorder %s10, 4
      %p72 = pnand %p70, %p71
      %p73 = pneg %p72
      // Predicated region
      $region9: #{tpu_custom_call.1} parent=5 // pred_check
        _
      $region10: #{tpu_custom_call.1} parent=5 // pred_check_branch
        %75 = sbr.rel (%p72) target = $region12
      $region11: #{tpu_custom_call.1} parent=5 // pred_region
        %s76 = ssub.s32 %s10, 1
      $region12: #{tpu_custom_call.1} parent=5 // pred_fallthru
        _
      %p77 = scmp.lt.s32.totalorder %s10, 3
      // Predicated region
      $region13: #{tpu_custom_call.1} parent=5 // pred_check
        %p78 = pneg %p77
      $region14: #{tpu_custom_call.1} parent=5 // pred_check_branch
        %80 = sbr.rel (%p78) target = $region16
      $region15: #{tpu_custom_call.1} parent=5 // pred_region
        // Predicated region
        $region17: #{tpu_custom_call.1} parent=15 // pred_check
          %p81 = pneg %p30
        $region18: #{tpu_custom_call.1} parent=15 // pred_check_branch
          %83 = sbr.rel (%p81) target = $region20
        $region19: #{tpu_custom_call.1} parent=15 // pred_region
          %s84 = sand.u32 %s20, 1
          %s85 = scalar_lea.sflag [#allocation3], %s84
          %s86 = sand.u32 %s20, 1
          %s87 = smul.addr %s86, 1024
          %s88 = scalar_lea.vmem [#allocation2], %s87
          %s89 = smul.u32 32, %s10
          %91 = vsyncadd %s85, 0
          %s92 = smul.addr %s89, 4
          %s93 = smul.addr %s92, 8
          %s94 = scalar_lea.hbm %s0, %s93
          %s95 = sshll.u32 %s94, 4
          %s96 = int_to_ptr.hbm [resolvable:$true] %s95
          %s97 = sshll.u32 %s88, 4
          %s98 = int_to_ptr.vmem [resolvable:$true] %s97
          %103 = dma.hbm_to_vmem [thread:$0]  %s96, 16384, %s98, %s85, 512, 512, 32
        $region20: #{tpu_custom_call.1} parent=15 // pred_fallthru
          _
      $region16: #{tpu_custom_call.1} parent=5 // pred_fallthru
        _
      %p104 = scmp.le.s32.totalorder 1, %s10
      %p105 = scmp.lt.s32.totalorder %s10, 4
      %p106 = pnand %p104, %p105
      %p107 = pneg %p106
      // Predicated region
      $region21: #{tpu_custom_call.1} parent=5 // pred_check
        _
      $region22: #{tpu_custom_call.1} parent=5 // pred_check_branch
        %109 = sbr.rel (%p106) target = $region24
      $region23: #{tpu_custom_call.1} parent=5 // pred_region
        %s110 = ssub.s32 %s10, 1
        %s111 = sand.u32 %s23, 1
        %s112 = scalar_lea.sflag [#allocation3], %s111
        %s113 = sand.u32 %s23, 1
        %s114 = smul.addr %s113, 1024
        %s115 = scalar_lea.vmem [#allocation2], %s114
        // Predicated region
        $region25: #{tpu_custom_call.1} parent=23 // pred_check
          %p116 = pneg %p36
        $region26: #{tpu_custom_call.1} parent=23 // pred_check_branch
          %118 = sbr.rel (%p116) target = $region28
        $region27: #{tpu_custom_call.1} parent=23 // pred_region
          %120 = dma.done %s112, 16384
        $region28: #{tpu_custom_call.1} parent=23 // pred_fallthru
          _
        %s121 = sand.u32 %s23, 1
        %s122 = scalar_lea.sflag [#allocation3], %s121
        %s123 = sand.u32 %s23, 1
        %s124 = smul.addr %s123, 1024
        %s125 = scalar_lea.vmem [#allocation2], %s124
        %p126 = pneg %p36
        %p127 = pneg %p33
        %p128 = pneg %p62
        %p129 = pneg %p59
        %s130 = smul.u32 32, %s15
        %p131 = scmp.lt.s32.totalorder %s130, 95
        %s132 = scalar_select %p131, %s130, 95
        %s133 = smul.addr %s132, 8
        %s134 = scalar_lea.vmem %s1, %s133
        %s135 = smul.u32 32, %s15
        %s136 = smul.u32 32, %s15
        %p137 = scmp.lt.s32.totalorder %s136, 95
        %s138 = scalar_select %p137, %s136, 95
        %s139 = smul.addr %s138, 8
        %s140 = scalar_lea.vmem %s1, %s139
        %s141 = smul.u32 32, %s15
        %v142 = vld [vmem:[%s115] sm:$0xff]
        %v143 = vld [vmem:[%s115 + $0x8] sm:$0xff]
        %v144 = vld [vmem:[%s115 + $0x10] sm:$0xff]
        %v145 = vld [vmem:[%s115 + $0x18] sm:$0xff]
        %v146 = vld [vmem:[%s115 + $0x20] sm:$0xff]
        %v147 = vld [vmem:[%s115 + $0x28] sm:$0xff]
        %v148 = vld [vmem:[%s115 + $0x30] sm:$0xff]
        %v149 = vld [vmem:[%s115 + $0x38] sm:$0xff]
        %v150 = vld [vmem:[%s115 + $0x40] sm:$0xff]
        %v151 = vld [vmem:[%s115 + $0x48] sm:$0xff]
        %v152 = vld [vmem:[%s115 + $0x50] sm:$0xff]
        %v153 = vld [vmem:[%s115 + $0x58] sm:$0xff]
        %v154 = vld [vmem:[%s115 + $0x60] sm:$0xff]
        %v155 = vld [vmem:[%s115 + $0x68] sm:$0xff]
        %v156 = vld [vmem:[%s115 + $0x70] sm:$0xff]
        %v157 = vld [vmem:[%s115 + $0x78] sm:$0xff]
        %v158 = vld [vmem:[%s115 + $0x80] sm:$0xff]
        %v159 = vld [vmem:[%s115 + $0x88] sm:$0xff]
        %v160 = vld [vmem:[%s115 + $0x90] sm:$0xff]
        %v161 = vld [vmem:[%s115 + $0x98] sm:$0xff]
        %v162 = vld [vmem:[%s115 + $0xa0] sm:$0xff]
        %v163 = vld [vmem:[%s115 + $0xa8] sm:$0xff]
        %v164 = vld [vmem:[%s115 + $0xb0] sm:$0xff]
        %v165 = vld [vmem:[%s115 + $0xb8] sm:$0xff]
        %v166 = vld [vmem:[%s115 + $0xc0] sm:$0xff]
        %v167 = vld [vmem:[%s115 + $0xc8] sm:$0xff]
        %v168 = vld [vmem:[%s115 + $0xd0] sm:$0xff]
        %v169 = vld [vmem:[%s115 + $0xd8] sm:$0xff]
        %v170 = vld [vmem:[%s115 + $0xe0] sm:$0xff]
        %v171 = vld [vmem:[%s115 + $0xe8] sm:$0xff]
        %v172 = vld [vmem:[%s115 + $0xf0] sm:$0xff]
        %v173 = vld [vmem:[%s115 + $0xf8] sm:$0xff]
        %v174 = vld [vmem:[%s115 + $0x100] sm:$0xff]
        %v175 = vld [vmem:[%s115 + $0x108] sm:$0xff]
        %v176 = vld [vmem:[%s115 + $0x110] sm:$0xff]
        %v177 = vld [vmem:[%s115 + $0x118] sm:$0xff]
        %v178 = vld [vmem:[%s115 + $0x120] sm:$0xff]
        %v179 = vld [vmem:[%s115 + $0x128] sm:$0xff]
        %v180 = vld [vmem:[%s115 + $0x130] sm:$0xff]
        %v181 = vld [vmem:[%s115 + $0x138] sm:$0xff]
        %v182 = vld [vmem:[%s115 + $0x140] sm:$0xff]
        %v183 = vld [vmem:[%s115 + $0x148] sm:$0xff]
        %v184 = vld [vmem:[%s115 + $0x150] sm:$0xff]
        %v185 = vld [vmem:[%s115 + $0x158] sm:$0xff]
        %v186 = vld [vmem:[%s115 + $0x160] sm:$0xff]
        %v187 = vld [vmem:[%s115 + $0x168] sm:$0xff]
        %v188 = vld [vmem:[%s115 + $0x170] sm:$0xff]
        %v189 = vld [vmem:[%s115 + $0x178] sm:$0xff]
        %v190 = vld [vmem:[%s115 + $0x180] sm:$0xff]
        %v191 = vld [vmem:[%s115 + $0x188] sm:$0xff]
        %v192 = vld [vmem:[%s115 + $0x190] sm:$0xff]
        %v193 = vld [vmem:[%s115 + $0x198] sm:$0xff]
        %v194 = vld [vmem:[%s115 + $0x1a0] sm:$0xff]
        %v195 = vld [vmem:[%s115 + $0x1a8] sm:$0xff]
        %v196 = vld [vmem:[%s115 + $0x1b0] sm:$0xff]
        %v197 = vld [vmem:[%s115 + $0x1b8] sm:$0xff]
        %v198 = vld [vmem:[%s115 + $0x1c0] sm:$0xff]
        %v199 = vld [vmem:[%s115 + $0x1c8] sm:$0xff]
        %v200 = vld [vmem:[%s115 + $0x1d0] sm:$0xff]
        %v201 = vld [vmem:[%s115 + $0x1d8] sm:$0xff]
        %v202 = vld [vmem:[%s115 + $0x1e0] sm:$0xff]
        %v203 = vld [vmem:[%s115 + $0x1e8] sm:$0xff]
        %v204 = vld [vmem:[%s115 + $0x1f0] sm:$0xff]
        %v205 = vld [vmem:[%s115 + $0x1f8] sm:$0xff]
        %v206 = vld [vmem:[%s115 + $0x200] sm:$0xff]
        %v207 = vld [vmem:[%s115 + $0x208] sm:$0xff]
        %v208 = vld [vmem:[%s115 + $0x210] sm:$0xff]
        %v209 = vld [vmem:[%s115 + $0x218] sm:$0xff]
        %v210 = vld [vmem:[%s115 + $0x220] sm:$0xff]
        %v211 = vld [vmem:[%s115 + $0x228] sm:$0xff]
        %v212 = vld [vmem:[%s115 + $0x230] sm:$0xff]
        %v213 = vld [vmem:[%s115 + $0x238] sm:$0xff]
        %v214 = vld [vmem:[%s115 + $0x240] sm:$0xff]
        %v215 = vld [vmem:[%s115 + $0x248] sm:$0xff]
        %v216 = vld [vmem:[%s115 + $0x250] sm:$0xff]
        %v217 = vld [vmem:[%s115 + $0x258] sm:$0xff]
        %v218 = vld [vmem:[%s115 + $0x260] sm:$0xff]
        %v219 = vld [vmem:[%s115 + $0x268] sm:$0xff]
        %v220 = vld [vmem:[%s115 + $0x270] sm:$0xff]
        %v221 = vld [vmem:[%s115 + $0x278] sm:$0xff]
        %v222 = vld [vmem:[%s115 + $0x280] sm:$0xff]
        %v223 = vld [vmem:[%s115 + $0x288] sm:$0xff]
        %v224 = vld [vmem:[%s115 + $0x290] sm:$0xff]
        %v225 = vld [vmem:[%s115 + $0x298] sm:$0xff]
        %v226 = vld [vmem:[%s115 + $0x2a0] sm:$0xff]
        %v227 = vld [vmem:[%s115 + $0x2a8] sm:$0xff]
        %v228 = vld [vmem:[%s115 + $0x2b0] sm:$0xff]
        %v229 = vld [vmem:[%s115 + $0x2b8] sm:$0xff]
        %v230 = vld [vmem:[%s115 + $0x2c0] sm:$0xff]
        %v231 = vld [vmem:[%s115 + $0x2c8] sm:$0xff]
        %v232 = vld [vmem:[%s115 + $0x2d0] sm:$0xff]
        %v233 = vld [vmem:[%s115 + $0x2d8] sm:$0xff]
        %v234 = vld [vmem:[%s115 + $0x2e0] sm:$0xff]
        %v235 = vld [vmem:[%s115 + $0x2e8] sm:$0xff]
        %v236 = vld [vmem:[%s115 + $0x2f0] sm:$0xff]
        %v237 = vld [vmem:[%s115 + $0x2f8] sm:$0xff]
        %v238 = vld [vmem:[%s115 + $0x300] sm:$0xff]
        %v239 = vld [vmem:[%s115 + $0x308] sm:$0xff]
        %v240 = vld [vmem:[%s115 + $0x310] sm:$0xff]
        %v241 = vld [vmem:[%s115 + $0x318] sm:$0xff]
        %v242 = vld [vmem:[%s115 + $0x320] sm:$0xff]
        %v243 = vld [vmem:[%s115 + $0x328] sm:$0xff]
        %v244 = vld [vmem:[%s115 + $0x330] sm:$0xff]
        %v245 = vld [vmem:[%s115 + $0x338] sm:$0xff]
        %v246 = vld [vmem:[%s115 + $0x340] sm:$0xff]
        %v247 = vld [vmem:[%s115 + $0x348] sm:$0xff]
        %v248 = vld [vmem:[%s115 + $0x350] sm:$0xff]
        %v249 = vld [vmem:[%s115 + $0x358] sm:$0xff]
        %v250 = vld [vmem:[%s115 + $0x360] sm:$0xff]
        %v251 = vld [vmem:[%s115 + $0x368] sm:$0xff]
        %v252 = vld [vmem:[%s115 + $0x370] sm:$0xff]
        %v253 = vld [vmem:[%s115 + $0x378] sm:$0xff]
        %v254 = vld [vmem:[%s115 + $0x380] sm:$0xff]
        %v255 = vld [vmem:[%s115 + $0x388] sm:$0xff]
        %v256 = vld [vmem:[%s115 + $0x390] sm:$0xff]
        %v257 = vld [vmem:[%s115 + $0x398] sm:$0xff]
        %v258 = vld [vmem:[%s115 + $0x3a0] sm:$0xff]
        %v259 = vld [vmem:[%s115 + $0x3a8] sm:$0xff]
        %v260 = vld [vmem:[%s115 + $0x3b0] sm:$0xff]
        %v261 = vld [vmem:[%s115 + $0x3b8] sm:$0xff]
        %v262 = vld [vmem:[%s115 + $0x3c0] sm:$0xff]
        %v263 = vld [vmem:[%s115 + $0x3c8] sm:$0xff]
        %v264 = vld [vmem:[%s115 + $0x3d0] sm:$0xff]
        %v265 = vld [vmem:[%s115 + $0x3d8] sm:$0xff]
        %v266 = vld [vmem:[%s115 + $0x3e0] sm:$0xff]
        %v267 = vld [vmem:[%s115 + $0x3e8] sm:$0xff]
        %v268 = vld [vmem:[%s115 + $0x3f0] sm:$0xff]
        %v269 = vld [vmem:[%s115 + $0x3f8] sm:$0xff]
        %v270 = vadd.f32 %v142, %v143
        %v271 = vadd.f32 %v146, %v147
        %v272 = vadd.f32 %v150, %v151
        %v273 = vadd.f32 %v154, %v155
        %v274 = vadd.f32 %v158, %v159
        %v275 = vadd.f32 %v162, %v163
        %v276 = vadd.f32 %v166, %v167
        %v277 = vadd.f32 %v170, %v171
        %v278 = vadd.f32 %v174, %v175
        %v279 = vadd.f32 %v178, %v179
        %v280 = vadd.f32 %v182, %v183
        %v281 = vadd.f32 %v186, %v187
        %v282 = vadd.f32 %v190, %v191
        %v283 = vadd.f32 %v194, %v195
        %v284 = vadd.f32 %v198, %v199
        %v285 = vadd.f32 %v202, %v203
        %v286 = vadd.f32 %v206, %v207
        %v287 = vadd.f32 %v210, %v211
        %v288 = vadd.f32 %v214, %v215
        %v289 = vadd.f32 %v218, %v219
        %v290 = vadd.f32 %v222, %v223
        %v291 = vadd.f32 %v226, %v227
        %v292 = vadd.f32 %v230, %v231
        %v293 = vadd.f32 %v234, %v235
        %v294 = vadd.f32 %v238, %v239
        %v295 = vadd.f32 %v242, %v243
        %v296 = vadd.f32 %v246, %v247
        %v297 = vadd.f32 %v250, %v251
        %v298 = vadd.f32 %v254, %v255
        %v299 = vadd.f32 %v258, %v259
        %v300 = vadd.f32 %v262, %v263
        %v301 = vadd.f32 %v266, %v267
        %v302 = vadd.f32 %v270, %v144
        %v303 = vadd.f32 %v271, %v148
        %v304 = vadd.f32 %v272, %v152
        %v305 = vadd.f32 %v273, %v156
        %v306 = vadd.f32 %v274, %v160
        %v307 = vadd.f32 %v275, %v164
        %v308 = vadd.f32 %v276, %v168
        %v309 = vadd.f32 %v277, %v172
        %v310 = vadd.f32 %v278, %v176
        %v311 = vadd.f32 %v279, %v180
        %v312 = vadd.f32 %v280, %v184
        %v313 = vadd.f32 %v281, %v188
        %v314 = vadd.f32 %v282, %v192
        %v315 = vadd.f32 %v283, %v196
        %v316 = vadd.f32 %v284, %v200
        %v317 = vadd.f32 %v285, %v204
        %v318 = vadd.f32 %v286, %v208
        %v319 = vadd.f32 %v287, %v212
        %v320 = vadd.f32 %v288, %v216
        %v321 = vadd.f32 %v289, %v220
        %v322 = vadd.f32 %v290, %v224
        %v323 = vadd.f32 %v291, %v228
        %v324 = vadd.f32 %v292, %v232
        %v325 = vadd.f32 %v293, %v236
        %v326 = vadd.f32 %v294, %v240
        %v327 = vadd.f32 %v295, %v244
        %v328 = vadd.f32 %v296, %v248
        %v329 = vadd.f32 %v297, %v252
        %v330 = vadd.f32 %v298, %v256
        %v331 = vadd.f32 %v299, %v260
        %v332 = vadd.f32 %v300, %v264
        %v333 = vadd.f32 %v301, %v268
        %v334 = vadd.f32 %v302, %v145
        %v335 = vadd.f32 %v303, %v149
        %v336 = vadd.f32 %v304, %v153
        %v337 = vadd.f32 %v305, %v157
        %v338 = vadd.f32 %v306, %v161
        %v339 = vadd.f32 %v307, %v165
        %v340 = vadd.f32 %v308, %v169
        %v341 = vadd.f32 %v309, %v173
        %v342 = vadd.f32 %v310, %v177
        %v343 = vadd.f32 %v311, %v181
        %v344 = vadd.f32 %v312, %v185
        %v345 = vadd.f32 %v313, %v189
        %v346 = vadd.f32 %v314, %v193
        %v347 = vadd.f32 %v315, %v197
        %v348 = vadd.f32 %v316, %v201
        %v349 = vadd.f32 %v317, %v205
        %v350 = vadd.f32 %v318, %v209
        %v351 = vadd.f32 %v319, %v213
        %v352 = vadd.f32 %v320, %v217
        %v353 = vadd.f32 %v321, %v221
        %v354 = vadd.f32 %v322, %v225
        %v355 = vadd.f32 %v323, %v229
        %v356 = vadd.f32 %v324, %v233
        %v357 = vadd.f32 %v325, %v237
        %v358 = vadd.f32 %v326, %v241
        %v359 = vadd.f32 %v327, %v245
        %v360 = vadd.f32 %v328, %v249
        %v361 = vadd.f32 %v329, %v253
        %v362 = vadd.f32 %v330, %v257
        %v363 = vadd.f32 %v331, %v261
        %v364 = vadd.f32 %v332, %v265
        %v365 = vadd.f32 %v333, %v269
        %v366 = vmul.f32 %v334, %v334
        %v367 = vmul.f32 %v335, %v335
        %v368 = vmul.f32 %v336, %v336
        %v369 = vmul.f32 %v337, %v337
        %v370 = vmul.f32 %v338, %v338
        %v371 = vmul.f32 %v339, %v339
        %v372 = vmul.f32 %v340, %v340
        %v373 = vmul.f32 %v341, %v341
        %v374 = vmul.f32 %v342, %v342
        %v375 = vmul.f32 %v343, %v343
        %v376 = vmul.f32 %v344, %v344
        %v377 = vmul.f32 %v345, %v345
        %v378 = vmul.f32 %v346, %v346
        %v379 = vmul.f32 %v347, %v347
        %v380 = vmul.f32 %v348, %v348
        %v381 = vmul.f32 %v349, %v349
        %v382 = vmul.f32 %v350, %v350
        %v383 = vmul.f32 %v351, %v351
        %v384 = vmul.f32 %v352, %v352
        %v385 = vmul.f32 %v353, %v353
        %v386 = vmul.f32 %v354, %v354
        %v387 = vmul.f32 %v355, %v355
        %v388 = vmul.f32 %v356, %v356
        %v389 = vmul.f32 %v357, %v357
        %v390 = vmul.f32 %v358, %v358
        %v391 = vmul.f32 %v359, %v359
        %v392 = vmul.f32 %v360, %v360
        %v393 = vmul.f32 %v361, %v361
        %v394 = vmul.f32 %v362, %v362
        %v395 = vmul.f32 %v363, %v363
        %v396 = vmul.f32 %v364, %v364
        %v397 = vmul.f32 %v365, %v365
        %398 = vadd.xlane.f32.xlu0 %v366
        %v399 = vpop.xlane.xlu0 %398
        %400 = vadd.xlane.f32.xlu0 %v367
        %v401 = vpop.xlane.xlu0 %400
        %402 = vadd.xlane.f32.xlu0 %v368
        %v403 = vpop.xlane.xlu0 %402
        %404 = vadd.xlane.f32.xlu0 %v369
        %v405 = vpop.xlane.xlu0 %404
        %406 = vadd.xlane.f32.xlu0 %v370
        %v407 = vpop.xlane.xlu0 %406
        %408 = vadd.xlane.f32.xlu0 %v371
        %v409 = vpop.xlane.xlu0 %408
        %410 = vadd.xlane.f32.xlu0 %v372
        %v411 = vpop.xlane.xlu0 %410
        %412 = vadd.xlane.f32.xlu0 %v373
        %v413 = vpop.xlane.xlu0 %412
        %414 = vadd.xlane.f32.xlu0 %v374
        %v415 = vpop.xlane.xlu0 %414
        %416 = vadd.xlane.f32.xlu0 %v375
        %v417 = vpop.xlane.xlu0 %416
        %418 = vadd.xlane.f32.xlu0 %v376
        %v419 = vpop.xlane.xlu0 %418
        %420 = vadd.xlane.f32.xlu0 %v377
        %v421 = vpop.xlane.xlu0 %420
        %422 = vadd.xlane.f32.xlu0 %v378
        %v423 = vpop.xlane.xlu0 %422
        %424 = vadd.xlane.f32.xlu0 %v379
        %v425 = vpop.xlane.xlu0 %424
        %426 = vadd.xlane.f32.xlu0 %v380
        %v427 = vpop.xlane.xlu0 %426
        %428 = vadd.xlane.f32.xlu0 %v381
        %v429 = vpop.xlane.xlu0 %428
        %430 = vadd.xlane.f32.xlu0 %v382
        %v431 = vpop.xlane.xlu0 %430
        %432 = vadd.xlane.f32.xlu0 %v383
        %v433 = vpop.xlane.xlu0 %432
        %434 = vadd.xlane.f32.xlu0 %v384
        %v435 = vpop.xlane.xlu0 %434
        %436 = vadd.xlane.f32.xlu0 %v385
        %v437 = vpop.xlane.xlu0 %436
        %438 = vadd.xlane.f32.xlu0 %v386
        %v439 = vpop.xlane.xlu0 %438
        %440 = vadd.xlane.f32.xlu0 %v387
        %v441 = vpop.xlane.xlu0 %440
        %442 = vadd.xlane.f32.xlu0 %v388
        %v443 = vpop.xlane.xlu0 %442
        %444 = vadd.xlane.f32.xlu0 %v389
        %v445 = vpop.xlane.xlu0 %444
        %446 = vadd.xlane.f32.xlu0 %v390
        %v447 = vpop.xlane.xlu0 %446
        %448 = vadd.xlane.f32.xlu0 %v391
        %v449 = vpop.xlane.xlu0 %448
        %450 = vadd.xlane.f32.xlu0 %v392
        %v451 = vpop.xlane.xlu0 %450
        %452 = vadd.xlane.f32.xlu0 %v393
        %v453 = vpop.xlane.xlu0 %452
        %454 = vadd.xlane.f32.xlu0 %v394
        %v455 = vpop.xlane.xlu0 %454
        %456 = vadd.xlane.f32.xlu0 %v395
        %v457 = vpop.xlane.xlu0 %456
        %458 = vadd.xlane.f32.xlu0 %v396
        %v459 = vpop.xlane.xlu0 %458
        %460 = vadd.xlane.f32.xlu0 %v397
        %v461 = vpop.xlane.xlu0 %460
        %v462 = vmul.f32 %v142, %v142
        %v463 = vmul.f32 %v143, %v143
        %v464 = vmul.f32 %v144, %v144
        %v465 = vmul.f32 %v145, %v145
        %v466 = vmul.f32 %v146, %v146
        %v467 = vmul.f32 %v147, %v147
        %v468 = vmul.f32 %v148, %v148
        %v469 = vmul.f32 %v149, %v149
        %v470 = vmul.f32 %v150, %v150
        %v471 = vmul.f32 %v151, %v151
        %v472 = vmul.f32 %v152, %v152
        %v473 = vmul.f32 %v153, %v153
        %v474 = vmul.f32 %v154, %v154
        %v475 = vmul.f32 %v155, %v155
        %v476 = vmul.f32 %v156, %v156
        %v477 = vmul.f32 %v157, %v157
        %v478 = vmul.f32 %v158, %v158
        %v479 = vmul.f32 %v159, %v159
        %v480 = vmul.f32 %v160, %v160
        %v481 = vmul.f32 %v161, %v161
        %v482 = vmul.f32 %v162, %v162
        %v483 = vmul.f32 %v163, %v163
        %v484 = vmul.f32 %v164, %v164
        %v485 = vmul.f32 %v165, %v165
        %v486 = vmul.f32 %v166, %v166
        %v487 = vmul.f32 %v167, %v167
        %v488 = vmul.f32 %v168, %v168
        %v489 = vmul.f32 %v169, %v169
        %v490 = vmul.f32 %v170, %v170
        %v491 = vmul.f32 %v171, %v171
        %v492 = vmul.f32 %v172, %v172
        %v493 = vmul.f32 %v173, %v173
        %v494 = vmul.f32 %v174, %v174
        %v495 = vmul.f32 %v175, %v175
        %v496 = vmul.f32 %v176, %v176
        %v497 = vmul.f32 %v177, %v177
        %v498 = vmul.f32 %v178, %v178
        %v499 = vmul.f32 %v179, %v179
        %v500 = vmul.f32 %v180, %v180
        %v501 = vmul.f32 %v181, %v181
        %v502 = vmul.f32 %v182, %v182
        %v503 = vmul.f32 %v183, %v183
        %v504 = vmul.f32 %v184, %v184
        %v505 = vmul.f32 %v185, %v185
        %v506 = vmul.f32 %v186, %v186
        %v507 = vmul.f32 %v187, %v187
        %v508 = vmul.f32 %v188, %v188
        %v509 = vmul.f32 %v189, %v189
        %v510 = vmul.f32 %v190, %v190
        %v511 = vmul.f32 %v191, %v191
        %v512 = vmul.f32 %v192, %v192
        %v513 = vmul.f32 %v193, %v193
        %v514 = vmul.f32 %v194, %v194
        %v515 = vmul.f32 %v195, %v195
        %v516 = vmul.f32 %v196, %v196
        %v517 = vmul.f32 %v197, %v197
        %v518 = vmul.f32 %v198, %v198
        %v519 = vmul.f32 %v199, %v199
        %v520 = vmul.f32 %v200, %v200
        %v521 = vmul.f32 %v201, %v201
        %v522 = vmul.f32 %v202, %v202
        %v523 = vmul.f32 %v203, %v203
        %v524 = vmul.f32 %v204, %v204
        %v525 = vmul.f32 %v205, %v205
        %v526 = vmul.f32 %v206, %v206
        %v527 = vmul.f32 %v207, %v207
        %v528 = vmul.f32 %v208, %v208
        %v529 = vmul.f32 %v209, %v209
        %v530 = vmul.f32 %v210, %v210
        %v531 = vmul.f32 %v211, %v211
        %v532 = vmul.f32 %v212, %v212
        %v533 = vmul.f32 %v213, %v213
        %v534 = vmul.f32 %v214, %v214
        %v535 = vmul.f32 %v215, %v215
        %v536 = vmul.f32 %v216, %v216
        %v537 = vmul.f32 %v217, %v217
        %v538 = vmul.f32 %v218, %v218
        %v539 = vmul.f32 %v219, %v219
        %v540 = vmul.f32 %v220, %v220
        %v541 = vmul.f32 %v221, %v221
        %v542 = vmul.f32 %v222, %v222
        %v543 = vmul.f32 %v223, %v223
        %v544 = vmul.f32 %v224, %v224
        %v545 = vmul.f32 %v225, %v225
        %v546 = vmul.f32 %v226, %v226
        %v547 = vmul.f32 %v227, %v227
        %v548 = vmul.f32 %v228, %v228
        %v549 = vmul.f32 %v229, %v229
        %v550 = vmul.f32 %v230, %v230
        %v551 = vmul.f32 %v231, %v231
        %v552 = vmul.f32 %v232, %v232
        %v553 = vmul.f32 %v233, %v233
        %v554 = vmul.f32 %v234, %v234
        %v555 = vmul.f32 %v235, %v235
        %v556 = vmul.f32 %v236, %v236
        %v557 = vmul.f32 %v237, %v237
        %v558 = vmul.f32 %v238, %v238
        %v559 = vmul.f32 %v239, %v239
        %v560 = vmul.f32 %v240, %v240
        %v561 = vmul.f32 %v241, %v241
        %v562 = vmul.f32 %v242, %v242
        %v563 = vmul.f32 %v243, %v243
        %v564 = vmul.f32 %v244, %v244
        %v565 = vmul.f32 %v245, %v245
        %v566 = vmul.f32 %v246, %v246
        %v567 = vmul.f32 %v247, %v247
        %v568 = vmul.f32 %v248, %v248
        %v569 = vmul.f32 %v249, %v249
        %v570 = vmul.f32 %v250, %v250
        %v571 = vmul.f32 %v251, %v251
        %v572 = vmul.f32 %v252, %v252
        %v573 = vmul.f32 %v253, %v253
        %v574 = vmul.f32 %v254, %v254
        %v575 = vmul.f32 %v255, %v255
        %v576 = vmul.f32 %v256, %v256
        %v577 = vmul.f32 %v257, %v257
        %v578 = vmul.f32 %v258, %v258
        %v579 = vmul.f32 %v259, %v259
        %v580 = vmul.f32 %v260, %v260
        %v581 = vmul.f32 %v261, %v261
        %v582 = vmul.f32 %v262, %v262
        %v583 = vmul.f32 %v263, %v263
        %v584 = vmul.f32 %v264, %v264
        %v585 = vmul.f32 %v265, %v265
        %v586 = vmul.f32 %v266, %v266
        %v587 = vmul.f32 %v267, %v267
        %v588 = vmul.f32 %v268, %v268
        %v589 = vmul.f32 %v269, %v269
        %v590 = vadd.f32 %v462, %v463
        %v591 = vadd.f32 %v590, %v464
        %v592 = vadd.f32 %v591, %v465
        %593 = vadd.xlane.f32.xlu0 %v592
        %v594 = vpop.xlane.xlu0 %593
        %v595 = vadd.f32 %v466, %v467
        %v596 = vadd.f32 %v595, %v468
        %v597 = vadd.f32 %v596, %v469
        %598 = vadd.xlane.f32.xlu0 %v597
        %v599 = vpop.xlane.xlu0 %598
        %v600 = vadd.f32 %v470, %v471
        %v601 = vadd.f32 %v600, %v472
        %v602 = vadd.f32 %v601, %v473
        %603 = vadd.xlane.f32.xlu0 %v602
        %v604 = vpop.xlane.xlu0 %603
        %v605 = vadd.f32 %v474, %v475
        %v606 = vadd.f32 %v605, %v476
        %v607 = vadd.f32 %v606, %v477
        %608 = vadd.xlane.f32.xlu0 %v607
        %v609 = vpop.xlane.xlu0 %608
        %v610 = vadd.f32 %v478, %v479
        %v611 = vadd.f32 %v610, %v480
        %v612 = vadd.f32 %v611, %v481
        %613 = vadd.xlane.f32.xlu0 %v612
        %v614 = vpop.xlane.xlu0 %613
        %v615 = vadd.f32 %v482, %v483
        %v616 = vadd.f32 %v615, %v484
        %v617 = vadd.f32 %v616, %v485
        %618 = vadd.xlane.f32.xlu0 %v617
        %v619 = vpop.xlane.xlu0 %618
        %v620 = vadd.f32 %v486, %v487
        %v621 = vadd.f32 %v620, %v488
        %v622 = vadd.f32 %v621, %v489
        %623 = vadd.xlane.f32.xlu0 %v622
        %v624 = vpop.xlane.xlu0 %623
        %v625 = vadd.f32 %v490, %v491
        %v626 = vadd.f32 %v625, %v492
        %v627 = vadd.f32 %v626, %v493
        %628 = vadd.xlane.f32.xlu0 %v627
        %v629 = vpop.xlane.xlu0 %628
        %v630 = vadd.f32 %v494, %v495
        %v631 = vadd.f32 %v630, %v496
        %v632 = vadd.f32 %v631, %v497
        %633 = vadd.xlane.f32.xlu0 %v632
        %v634 = vpop.xlane.xlu0 %633
        %v635 = vadd.f32 %v498, %v499
        %v636 = vadd.f32 %v635, %v500
        %v637 = vadd.f32 %v636, %v501
        %638 = vadd.xlane.f32.xlu0 %v637
        %v639 = vpop.xlane.xlu0 %638
        %v640 = vadd.f32 %v502, %v503
        %v641 = vadd.f32 %v640, %v504
        %v642 = vadd.f32 %v641, %v505
        %643 = vadd.xlane.f32.xlu0 %v642
        %v644 = vpop.xlane.xlu0 %643
        %v645 = vadd.f32 %v506, %v507
        %v646 = vadd.f32 %v645, %v508
        %v647 = vadd.f32 %v646, %v509
        %648 = vadd.xlane.f32.xlu0 %v647
        %v649 = vpop.xlane.xlu0 %648
        %v650 = vadd.f32 %v510, %v511
        %v651 = vadd.f32 %v650, %v512
        %v652 = vadd.f32 %v651, %v513
        %653 = vadd.xlane.f32.xlu0 %v652
        %v654 = vpop.xlane.xlu0 %653
        %v655 = vadd.f32 %v514, %v515
        %v656 = vadd.f32 %v655, %v516
        %v657 = vadd.f32 %v656, %v517
        %658 = vadd.xlane.f32.xlu0 %v657
        %v659 = vpop.xlane.xlu0 %658
        %v660 = vadd.f32 %v518, %v519
        %v661 = vadd.f32 %v660, %v520
        %v662 = vadd.f32 %v661, %v521
        %663 = vadd.xlane.f32.xlu0 %v662
        %v664 = vpop.xlane.xlu0 %663
        %v665 = vadd.f32 %v522, %v523
        %v666 = vadd.f32 %v665, %v524
        %v667 = vadd.f32 %v666, %v525
        %668 = vadd.xlane.f32.xlu0 %v667
        %v669 = vpop.xlane.xlu0 %668
        %v670 = vadd.f32 %v526, %v527
        %v671 = vadd.f32 %v670, %v528
        %v672 = vadd.f32 %v671, %v529
        %673 = vadd.xlane.f32.xlu0 %v672
        %v674 = vpop.xlane.xlu0 %673
        %v675 = vadd.f32 %v530, %v531
        %v676 = vadd.f32 %v675, %v532
        %v677 = vadd.f32 %v676, %v533
        %678 = vadd.xlane.f32.xlu0 %v677
        %v679 = vpop.xlane.xlu0 %678
        %v680 = vadd.f32 %v534, %v535
        %v681 = vadd.f32 %v680, %v536
        %v682 = vadd.f32 %v681, %v537
        %683 = vadd.xlane.f32.xlu0 %v682
        %v684 = vpop.xlane.xlu0 %683
        %v685 = vadd.f32 %v538, %v539
        %v686 = vadd.f32 %v685, %v540
        %v687 = vadd.f32 %v686, %v541
        %688 = vadd.xlane.f32.xlu0 %v687
        %v689 = vpop.xlane.xlu0 %688
        %v690 = vadd.f32 %v542, %v543
        %v691 = vadd.f32 %v690, %v544
        %v692 = vadd.f32 %v691, %v545
        %693 = vadd.xlane.f32.xlu0 %v692
        %v694 = vpop.xlane.xlu0 %693
        %v695 = vadd.f32 %v546, %v547
        %v696 = vadd.f32 %v695, %v548
        %v697 = vadd.f32 %v696, %v549
        %698 = vadd.xlane.f32.xlu0 %v697
        %v699 = vpop.xlane.xlu0 %698
        %v700 = vadd.f32 %v550, %v551
        %v701 = vadd.f32 %v700, %v552
        %v702 = vadd.f32 %v701, %v553
        %703 = vadd.xlane.f32.xlu0 %v702
        %v704 = vpop.xlane.xlu0 %703
        %v705 = vadd.f32 %v554, %v555
        %v706 = vadd.f32 %v705, %v556
        %v707 = vadd.f32 %v706, %v557
        %708 = vadd.xlane.f32.xlu0 %v707
        %v709 = vpop.xlane.xlu0 %708
        %v710 = vadd.f32 %v558, %v559
        %v711 = vadd.f32 %v710, %v560
        %v712 = vadd.f32 %v711, %v561
        %713 = vadd.xlane.f32.xlu0 %v712
        %v714 = vpop.xlane.xlu0 %713
        %v715 = vadd.f32 %v562, %v563
        %v716 = vadd.f32 %v715, %v564
        %v717 = vadd.f32 %v716, %v565
        %718 = vadd.xlane.f32.xlu0 %v717
        %v719 = vpop.xlane.xlu0 %718
        %v720 = vadd.f32 %v566, %v567
        %v721 = vadd.f32 %v720, %v568
        %v722 = vadd.f32 %v721, %v569
        %723 = vadd.xlane.f32.xlu0 %v722
        %v724 = vpop.xlane.xlu0 %723
        %v725 = vadd.f32 %v570, %v571
        %v726 = vadd.f32 %v725, %v572
        %v727 = vadd.f32 %v726, %v573
        %728 = vadd.xlane.f32.xlu0 %v727
        %v729 = vpop.xlane.xlu0 %728
        %v730 = vadd.f32 %v574, %v575
        %v731 = vadd.f32 %v730, %v576
        %v732 = vadd.f32 %v731, %v577
        %733 = vadd.xlane.f32.xlu0 %v732
        %v734 = vpop.xlane.xlu0 %733
        %v735 = vadd.f32 %v578, %v579
        %v736 = vadd.f32 %v735, %v580
        %v737 = vadd.f32 %v736, %v581
        %738 = vadd.xlane.f32.xlu0 %v737
        %v739 = vpop.xlane.xlu0 %738
        %v740 = vadd.f32 %v582, %v583
        %v741 = vadd.f32 %v740, %v584
        %v742 = vadd.f32 %v741, %v585
        %743 = vadd.xlane.f32.xlu0 %v742
        %v744 = vpop.xlane.xlu0 %743
        %v745 = vadd.f32 %v586, %v587
        %v746 = vadd.f32 %v745, %v588
        %v747 = vadd.f32 %v746, %v589
        %748 = vadd.xlane.f32.xlu0 %v747
        %v749 = vpop.xlane.xlu0 %748
        %v750 = vsub.f32 %v399, %v594
        %v751 = vsub.f32 %v401, %v599
        %v752 = vsub.f32 %v403, %v604
        %v753 = vsub.f32 %v405, %v609
        %v754 = vsub.f32 %v407, %v614
        %v755 = vsub.f32 %v409, %v619
        %v756 = vsub.f32 %v411, %v624
        %v757 = vsub.f32 %v413, %v629
        %v758 = vsub.f32 %v415, %v634
        %v759 = vsub.f32 %v417, %v639
        %v760 = vsub.f32 %v419, %v644
        %v761 = vsub.f32 %v421, %v649
        %v762 = vsub.f32 %v423, %v654
        %v763 = vsub.f32 %v425, %v659
        %v764 = vsub.f32 %v427, %v664
        %v765 = vsub.f32 %v429, %v669
        %v766 = vsub.f32 %v431, %v674
        %v767 = vsub.f32 %v433, %v679
        %v768 = vsub.f32 %v435, %v684
        %v769 = vsub.f32 %v437, %v689
        %v770 = vsub.f32 %v439, %v694
        %v771 = vsub.f32 %v441, %v699
        %v772 = vsub.f32 %v443, %v704
        %v773 = vsub.f32 %v445, %v709
        %v774 = vsub.f32 %v447, %v714
        %v775 = vsub.f32 %v449, %v719
        %v776 = vsub.f32 %v451, %v724
        %v777 = vsub.f32 %v453, %v729
        %v778 = vsub.f32 %v455, %v734
        %v779 = vsub.f32 %v457, %v739
        %v780 = vsub.f32 %v459, %v744
        %v781 = vsub.f32 %v461, %v749
        %v782 = vmul.f32 %v750, 0.5
        %v783 = vmul.f32 %v751, 0.5
        %v784 = vmul.f32 %v752, 0.5
        %v785 = vmul.f32 %v753, 0.5
        %v786 = vmul.f32 %v754, 0.5
        %v787 = vmul.f32 %v755, 0.5
        %v788 = vmul.f32 %v756, 0.5
        %v789 = vmul.f32 %v757, 0.5
        %v790 = vmul.f32 %v758, 0.5
        %v791 = vmul.f32 %v759, 0.5
        %v792 = vmul.f32 %v760, 0.5
        %v793 = vmul.f32 %v761, 0.5
        %v794 = vmul.f32 %v762, 0.5
        %v795 = vmul.f32 %v763, 0.5
        %v796 = vmul.f32 %v764, 0.5
        %v797 = vmul.f32 %v765, 0.5
        %v798 = vmul.f32 %v766, 0.5
        %v799 = vmul.f32 %v767, 0.5
        %v800 = vmul.f32 %v768, 0.5
        %v801 = vmul.f32 %v769, 0.5
        %v802 = vmul.f32 %v770, 0.5
        %v803 = vmul.f32 %v771, 0.5
        %v804 = vmul.f32 %v772, 0.5
        %v805 = vmul.f32 %v773, 0.5
        %v806 = vmul.f32 %v774, 0.5
        %v807 = vmul.f32 %v775, 0.5
        %v808 = vmul.f32 %v776, 0.5
        %v809 = vmul.f32 %v777, 0.5
        %v810 = vmul.f32 %v778, 0.5
        %v811 = vmul.f32 %v779, 0.5
        %v812 = vmul.f32 %v780, 0.5
        %v813 = vmul.f32 %v781, 0.5
        %vm814 = vcmask 7168
        %815 = vst.msk [vmem:[%s140] sm:$0xff] %vm814, %v782
        %816 = vst.msk [vmem:[%s140 + $0x8] sm:$0xff] %vm814, %v783
        %817 = vst.msk [vmem:[%s140 + $0x10] sm:$0xff] %vm814, %v784
        %818 = vst.msk [vmem:[%s140 + $0x18] sm:$0xff] %vm814, %v785
        %819 = vst.msk [vmem:[%s140 + $0x20] sm:$0xff] %vm814, %v786
        %820 = vst.msk [vmem:[%s140 + $0x28] sm:$0xff] %vm814, %v787
        %821 = vst.msk [vmem:[%s140 + $0x30] sm:$0xff] %vm814, %v788
        %822 = vst.msk [vmem:[%s140 + $0x38] sm:$0xff] %vm814, %v789
        %823 = vst.msk [vmem:[%s140 + $0x40] sm:$0xff] %vm814, %v790
        %824 = vst.msk [vmem:[%s140 + $0x48] sm:$0xff] %vm814, %v791
        %825 = vst.msk [vmem:[%s140 + $0x50] sm:$0xff] %vm814, %v792
        %826 = vst.msk [vmem:[%s140 + $0x58] sm:$0xff] %vm814, %v793
        %827 = vst.msk [vmem:[%s140 + $0x60] sm:$0xff] %vm814, %v794
        %828 = vst.msk [vmem:[%s140 + $0x68] sm:$0xff] %vm814, %v795
        %829 = vst.msk [vmem:[%s140 + $0x70] sm:$0xff] %vm814, %v796
        %830 = vst.msk [vmem:[%s140 + $0x78] sm:$0xff] %vm814, %v797
        %831 = vst.msk [vmem:[%s140 + $0x80] sm:$0xff] %vm814, %v798
        %832 = vst.msk [vmem:[%s140 + $0x88] sm:$0xff] %vm814, %v799
        %833 = vst.msk [vmem:[%s140 + $0x90] sm:$0xff] %vm814, %v800
        %834 = vst.msk [vmem:[%s140 + $0x98] sm:$0xff] %vm814, %v801
        %835 = vst.msk [vmem:[%s140 + $0xa0] sm:$0xff] %vm814, %v802
        %836 = vst.msk [vmem:[%s140 + $0xa8] sm:$0xff] %vm814, %v803
        %837 = vst.msk [vmem:[%s140 + $0xb0] sm:$0xff] %vm814, %v804
        %838 = vst.msk [vmem:[%s140 + $0xb8] sm:$0xff] %vm814, %v805
        %839 = vst.msk [vmem:[%s140 + $0xc0] sm:$0xff] %vm814, %v806
        %840 = vst.msk [vmem:[%s140 + $0xc8] sm:$0xff] %vm814, %v807
        %841 = vst.msk [vmem:[%s140 + $0xd0] sm:$0xff] %vm814, %v808
        %842 = vst.msk [vmem:[%s140 + $0xd8] sm:$0xff] %vm814, %v809
        %843 = vst.msk [vmem:[%s140 + $0xe0] sm:$0xff] %vm814, %v810
        %844 = vst.msk [vmem:[%s140 + $0xe8] sm:$0xff] %vm814, %v811
        %845 = vst.msk [vmem:[%s140 + $0xf0] sm:$0xff] %vm814, %v812
        %846 = vst.msk [vmem:[%s140 + $0xf8] sm:$0xff] %vm814, %v813
        %s847 = smul.u32 32, %s15
        %p848 = scmp.lt.s32.totalorder %s847, 95
        %s849 = scalar_select %p848, %s847, 95
        %s850 = smul.addr %s849, 8
        %s851 = scalar_lea.vmem %s1, %s850
        // Predicated region
        $region29: #{tpu_custom_call.1} parent=23 // pred_check
          %p852 = pneg %p59
        $region30: #{tpu_custom_call.1} parent=23 // pred_check_branch
          %854 = sbr.rel (%p852) target = $region32
        $region31: #{tpu_custom_call.1} parent=23 // pred_region
          %s855 = smul.u32 32, %s15
        $region32: #{tpu_custom_call.1} parent=23 // pred_fallthru
          _
      $region24: #{tpu_custom_call.1} parent=5 // pred_fallthru
        _
      %p856 = scmp.le.s32.totalorder 2, %s10
      // Predicated region
      $region33: #{tpu_custom_call.1} parent=5 // pred_check
        %p857 = pneg %p856
      $region34: #{tpu_custom_call.1} parent=5 // pred_check_branch
        %859 = sbr.rel (%p857) target = $region36
      $region35: #{tpu_custom_call.1} parent=5 // pred_region
        %s860 = ssub.s32 %s10, 2
        // Predicated region
        $region37: #{tpu_custom_call.1} parent=35 // pred_check
          %p861 = pneg %p65
        $region38: #{tpu_custom_call.1} parent=35 // pred_check_branch
          %863 = sbr.rel (%p861) target = $region40
        $region39: #{tpu_custom_call.1} parent=35 // pred_region
          %s864 = smul.u32 32, %s16
          %p865 = scmp.lt.s32.totalorder %s864, 95
          %s866 = scalar_select %p865, %s864, 95
          %s867 = smul.addr %s866, 8
          %s868 = scalar_lea.vmem %s1, %s867
        $region40: #{tpu_custom_call.1} parent=35 // pred_fallthru
          _
      $region36: #{tpu_custom_call.1} parent=5 // pred_fallthru
        _
    $region6: #{tpu_custom_call.1} parent=1 // loop_footer
      %s14 = sadd.s32 1, %s10
    $region7: #{tpu_custom_call.1} parent=1 // loop_footer_branch
      %9 = sbr.rel target = $region3
    $region8: #{tpu_custom_call.1} parent=1 // loop_exit
      _
    %869 = vsyncpa [#allocation3], 1
    %s870 = scalar_lea.sflag [#allocation3], 1
    %871 = vsyncpa %s870, 1

</llo_original>
